<compile_context>
chip_gen: v7x
topology: tpu7x:2x2x1
jax: 0.10.0
libtpu: 0.0.40
codegen_flags: <defaults>
</compile_context>

<pallas_src>
import jax
import jax.numpy as jnp
from jax.experimental import pallas as pl
from jax.experimental.pallas import tpu as pltpu

LN_EPS = 1e-12          # Config.layer_norm_eps (BERT default)


def _round_up(x: int, m: int) -> int:
    return (x + m - 1) // m * m


def _tpu_caps():
    """Return (physical VMEM bytes, TensorCores per chip) from the device kind string."""
    try:
        kind = jax.devices()[0].device_kind.lower()
    except Exception:
        kind = ""
    if "v7" in kind:
        return 64 * 1024 * 1024, 2                    # v7x: 64 MiB VMEM, 2 TCs/chip
    if ("lite" in kind) or ("v5e" in kind) or ("v6e" in kind):
        return 128 * 1024 * 1024, 1                   # v5e / v6e: 128 MiB, 1 TC
    if ("v4" in kind) or ("v5p" in kind) or ("v5" in kind) or ("v6" in kind):
        return 128 * 1024 * 1024, 2                   # megacore generations
    return 64 * 1024 * 1024, 2                        # unknown: conservative


def _pick_row_tile(rows: int, tr_cap: int, n_tc: int):
    """Pick TR (mult of 16) <= tr_cap. Prefer a divisor of rows (no tail pad / no slice);
    on multi-TC chips make sure the grid has >= n_tc steps so every core gets work."""
    tr_cap = max(16, (tr_cap // 16) * 16)
    want_steps = n_tc if n_tc > 1 else 1
    can_split = rows >= 16 * want_steps
    if rows % 16 == 0:
        for tr in range(tr_cap, 15, -16):
            if rows % tr:
                continue
            if can_split and rows // tr < want_steps:
                continue
            return tr, rows                            # exact fit: rows_pad == rows
    tr = tr_cap
    if can_split:
        tr = min(tr, max(16, (_round_up(rows, 16) // want_steps) // 16 * 16))
    return tr, _round_up(rows, tr)


# --------------------------------------------------------------------------- #
# Pallas kernel (one row tile per grid step)
# --------------------------------------------------------------------------- #
def _make_kernel(h_real: int):
    """h_real = real (unpadded) feature size used for the LayerNorm statistics."""
    inv_h = 1.0 / float(h_real)

    def kernel(char_ref, wsrc_ref, state_ref, wT_ref, p_ref, out_ref):
        # char_ref  : (TR, Hp)  f32   padded BERT char vectors (zeros in padded lanes)
        # wsrc_ref  : (TR, Hwp) bf16  gathered+compacted raw w2v vectors (zero-padded Hw)
        # state_ref : (TR, 1)   i32   0 = pad row, 1 = char row, 2 = word row
        # wT_ref    : (Hwp, Hp) bf16  transposed w2v_linear weight (zero-padded rows/cols)
        # p_ref     : (8, Hp)   f32   row 0 = bias, 1 = gamma, 2 = beta, 3 = lane mask
        # out_ref   : (TR, Hp)

        bias  = p_ref[0:1, :]
        gamma = p_ref[1:2, :]
        beta  = p_ref[2:3, :]
        lmask = p_ref[3:4, :]                      # 1.0 on real feature lanes, 0.0 on pad

        # ---- w2v_linear: bf16 MXU matmul, f32 accumulation, + bias ----
        proj = jnp.dot(wsrc_ref[...], wT_ref[...],
                       preferred_element_type=jnp.float32) + bias          # (TR, Hp)

        # ---- select BERT char vec vs projected word vec (narrow (TR,1) predicate) ----
        st = state_ref[...]                                                 # (TR, 1) i32
        pre = jnp.where(st == 2, proj, char_ref[...])                       # (TR, Hp)

        # ---- two-pass LayerNorm over the real feature axis ----
        # Padded feature lanes of `pre` are exactly zero, so the full-width sum / h_real
        # gives the correct mean; the variance uses the lane mask so the (-mu) in padded
        # lanes does not corrupt the sum of squares.
        mu = jnp.sum(pre, axis=-1, keepdims=True) * inv_h
        centered = pre - mu
        cm = centered * lmask
        var = jnp.sum(cm * cm, axis=-1, keepdims=True) * inv_h
        ln = centered * jax.lax.rsqrt(var + LN_EPS) * gamma + beta

        # dropout is identity in eval mode; pad rows are zeroed (as in the torch code)
        out_ref[...] = jnp.where(st > 0, ln, 0.0).astype(out_ref.dtype)

    return kernel


# --------------------------------------------------------------------------- #
# Glue: synthetic BERT vectors + per-sample compaction (index plumbing only)
# --------------------------------------------------------------------------- #
def _prepare(params, inputs):
    token_ids = inputs['text'].astype(jnp.int32)          # (B, S_char)
    mask = inputs['mask'].astype(jnp.int32)               # (B, S_char)
    word_idx = inputs['word_idx'].astype(jnp.int32)       # (B, S_char)
    word_mask = inputs['word_mask'].astype(jnp.int32)     # (B, S_total)
    char_len = inputs['char_len'].astype(jnp.int32)       # (B,)
    word_pos_b = inputs['word_pos_b'].astype(jnp.int32)   # (B, S_total)
    word_pos_e = inputs['word_pos_e'].astype(jnp.int32)   # (B, S_total)

    B, S_char = token_ids.shape
    S_total = word_mask.shape[1]

    # TODO(synk): pretrained BertModel (hidden layer Config.num_ptm_layers) has no
    # in-script Pallas equivalent; replaced by a deterministic synthetic embedding.
    char_vec = params['tok_emb'][token_ids] + params['pos_emb'][None, :S_char, :]

    # ---- compaction: [bert chars | nonzero word_idx words | pads] per sample ----
    j = jnp.arange(S_char)[None, :]
    is_word_src = (j >= char_len[:, None]) & (word_idx != 0)               # (B, S_char)
    n_words = jnp.sum(is_word_src.astype(jnp.int32), axis=1)               # (B,)
    rank = jnp.cumsum(is_word_src.astype(jnp.int32), axis=1) - 1
    dest = jnp.where(is_word_src, char_len[:, None] + rank, S_total)       # drop bucket
    bidx = jnp.broadcast_to(jnp.arange(B)[:, None], dest.shape)
    word_id_at_out = jnp.zeros((B, S_total + 1), jnp.int32)
    word_id_at_out = word_id_at_out.at[bidx, dest].set(
        jnp.where(is_word_src, word_idx, 0))[:, :S_total]                  # (B, S_total)
    word_src = params['w2v_table'][word_id_at_out]                         # (B, S_total, Hw)

    # per-position state code: 0 = pad, 1 = bert char, 2 = word
    p = jnp.arange(S_total)[None, :]
    sel_char = p < char_len[:, None]
    sel_word = (~sel_char) & (p < (char_len + n_words)[:, None])
    state = sel_char.astype(jnp.int32) + 2 * sel_word.astype(jnp.int32)    # (B, S_total)

    mask_pad = jnp.pad(mask, ((0, 0), (0, S_total - S_char)))

    return dict(
        char_vec=char_vec, word_src=word_src, state=state,
        mask_pad=mask_pad, word_mask=word_mask,
        word_pos_b=word_pos_b, word_pos_e=word_pos_e,
        B=B, S_char=S_char, S_total=S_total,
        H=char_vec.shape[-1], Hw=word_src.shape[-1],
    )


# --------------------------------------------------------------------------- #
# Wrapper: Pallas call
# --------------------------------------------------------------------------- #
def encoder_forward(params, inputs, *, row_tile=2048, out_dtype=jnp.float32,
                    return_padded=False):
    g = _prepare(params, inputs)
    B, S, S_char = g['B'], g['S_total'], g['S_char']
    H, Hw = g['H'], g['Hw']

    rows = B * S
    Hp = _round_up(H, 128)                         # lane-dense feature width
    Hwp = _round_up(Hw, 64)                        # 128-byte-aligned bf16 rows

    # ---- hardware-aware row tile / VMEM budget ----
    vmem_phys, n_tc = _tpu_caps()
    vmem_limit = int(vmem_phys * 3 // 4)           # v7x: 48 MiB, v5e/v6e: 96 MiB
    out_isz = jnp.dtype(out_dtype).itemsize
    per_row = Hp * 4 + Hwp * 2 + 128 * 4 + Hp * out_isz        # char + wsrc + state + out
    reserve = 2 * (Hwp * Hp * 2 + 8 * Hp * 4) + (2 << 20)      # weights/params + misc
    tile_budget = max(vmem_limit - reserve, 1 << 20)
    tr_vmem_max = max(16, (tile_budget // (2 * per_row)) // 16 * 16)
    tr_cap = max(16, min(row_tile, tr_vmem_max, _round_up(rows, 16)))
    TR, rows_pad = _pick_row_tile(rows, tr_cap, n_tc)

    # ---- build operands: one 3-D pad per stream, layout-free flatten, optional tail pad ----
    char3 = jnp.pad(g['char_vec'].astype(jnp.float32),
                    ((0, 0), (0, S - S_char), (0, Hp - H)))                 # (B, S, Hp)
    char_flat = char3.reshape(rows, Hp)
    wsrc3 = jnp.pad(g['word_src'], ((0, 0), (0, 0), (0, Hwp - Hw))).astype(jnp.bfloat16)
    wsrc_flat = wsrc3.reshape(rows, Hwp)
    state_flat = g['state'].reshape(rows, 1)
    if rows_pad != rows:
        char_flat = jnp.pad(char_flat, ((0, rows_pad - rows), (0, 0)))
        wsrc_flat = jnp.pad(wsrc_flat, ((0, rows_pad - rows), (0, 0)))
        state_flat = jnp.pad(state_flat, ((0, rows_pad - rows), (0, 0)))     # pad rows -> 0

    wT = jnp.pad(params['w2v_linear_w'].T,
                 ((0, Hwp - Hw), (0, Hp - H))).astype(jnp.bfloat16)          # (Hwp, Hp)

    # packed parameter block: row 0 bias, 1 gamma, 2 beta, 3 lane-mask; padded lanes = 0
    pblock = jnp.zeros((8, Hp), jnp.float32)
    pblock = pblock.at[0, :H].set(params['w2v_linear_b'].astype(jnp.float32))
    pblock = pblock.at[1, :H].set(params['ln_gamma'].astype(jnp.float32))
    pblock = pblock.at[2, :H].set(params['ln_beta'].astype(jnp.float32))
    pblock = pblock.at[3, :H].set(1.0)

    vec_pad = pl.pallas_call(
        _make_kernel(H),
        grid=(rows_pad // TR,),
        in_specs=[
            pl.BlockSpec((TR, Hp), lambda i: (i, 0)),    # char vectors
            pl.BlockSpec((TR, Hwp), lambda i: (i, 0)),   # raw word vectors (bf16)
            pl.BlockSpec((TR, 1), lambda i: (i, 0)),     # per-row state code
            pl.BlockSpec((Hwp, Hp), lambda i: (0, 0)),   # w2v_linear weight^T (bf16)
            pl.BlockSpec((8, Hp), lambda i: (0, 0)),     # packed bias/gamma/beta/mask
        ],
        out_specs=pl.BlockSpec((TR, Hp), lambda i: (i, 0)),
        out_shape=jax.ShapeDtypeStruct((rows_pad, Hp), out_dtype),
        compiler_params=pltpu.CompilerParams(
            dimension_semantics=("parallel",),            # rows are independent
            vmem_limit_bytes=vmem_limit,
            allow_input_fusion=[True, True, True, False, False],
        ),
        # NOTE: with TR this large, extra pipeline depth (pl.Buffered) is unnecessary.
    )(char_flat, wsrc_flat, state_flat, wT, pblock)

    # ---- output: row reshape is layout-free when rows_pad == rows (the common case) ----
    vec = vec_pad
    if rows_pad != rows:
        vec = vec[:rows]
    vec = vec.reshape(B, S, Hp)
    if (not return_padded) and Hp != H:
        vec = vec[..., :H]                                # only when H isn't lane-aligned
    char_word_vec = vec

    # ---- integer side: trivial index arithmetic, kept as fused plain-JAX ops ----
    pos = jnp.arange(S, dtype=jnp.int32)[None, :] * g['mask_pad']
    char_word_s = pos + g['word_pos_b']
    char_word_e = pos + g['word_pos_e']
    char_word_mask = (g['mask_pad'] != 0) | (g['word_mask'] != 0)

    return {
        'char_word_vec': char_word_vec,
        'char_word_mask': char_word_mask,
        'char_word_s': char_word_s,
        'char_word_e': char_word_e,
        'char_len': S_char,               # torch returns mask.size(1) (padded char length)
    }


# --------------------------------------------------------------------------- #
# Pure-JAX reference (same glue & matmul precision, plain jnp hot path)
# --------------------------------------------------------------------------- #
def encoder_forward_ref(params, inputs):
    g = _prepare(params, inputs)
    B, S, S_char, H = g['B'], g['S_total'], g['S_char'], g['H']
    char_vec_pad = jnp.pad(g['char_vec'], ((0, 0), (0, S - S_char), (0, 0)))
    wT = params['w2v_linear_w'].T.astype(jnp.bfloat16)
    proj = jnp.einsum('bsk,kh->bsh', g['word_src'].astype(jnp.bfloat16), wT,
                      preferred_element_type=jnp.float32) + params['w2v_linear_b']
    is_word = (g['state'] == 2)[..., None]
    pre = jnp.where(is_word, proj, char_vec_pad)
    mu = pre.mean(-1, keepdims=True)
    var = ((pre - mu) ** 2).mean(-1, keepdims=True)
    ln = (pre - mu) * jax.lax.rsqrt(var + LN_EPS) * params['ln_gamma'] + params['ln_beta']
    vec = jnp.where((g['state'] > 0)[..., None], ln, 0.0)

    pos = jnp.arange(S, dtype=jnp.int32)[None, :] * g['mask_pad']
    return {
        'char_word_vec': vec,
        'char_word_mask': (g['mask_pad'] != 0) | (g['word_mask'] != 0),
        'char_word_s': pos + g['word_pos_b'],
        'char_word_e': pos + g['word_pos_e'],
        'char_len': S_char,
    }


# --------------------------------------------------------------------------- #
if __name__ == "__main__":
    B, S_char, S_total = 2, 16, 24
    H, Hw = 96, 48          # ptm_feat_size, w2v_feat_size (H lane-padded to 128 inside)
    vocab, w2v_vocab = 50, 40

    key = jax.random.PRNGKey(0)
    ks = jax.random.split(key, 8)

    params = {
        'tok_emb': jax.random.normal(ks[0], (vocab, H), jnp.float32) * 0.1,
        'pos_emb': jax.random.normal(ks[1], (S_char, H), jnp.float32) * 0.1,
        'w2v_table': jax.random.normal(ks[2], (w2v_vocab, Hw), jnp.float32) * 0.1,
        'w2v_linear_w': jax.random.normal(ks[3], (H, Hw), jnp.float32) / jnp.sqrt(Hw),
        'w2v_linear_b': jax.random.normal(ks[4], (H,), jnp.float32) * 0.01,
        'ln_gamma': jnp.ones((H,), jnp.float32),
        'ln_beta': jnp.zeros((H,), jnp.float32),
    }

    char_len = jnp.array([10, 13], jnp.int32)
    token_ids = jax.random.randint(ks[5], (B, S_char), 1, vocab).astype(jnp.int32)
    mask = (jnp.arange(S_char)[None, :] < char_len[:, None]).astype(jnp.int32)

    # word lattice ids live in [char_len, S_char); include a zero gap to exercise compaction
    word_idx = jnp.zeros((B, S_char), jnp.int32)
    word_idx = word_idx.at[0, 10].set(5).at[0, 11].set(7).at[0, 13].set(9)
    word_idx = word_idx.at[1, 13].set(3).at[1, 14].set(12)

    word_mask = jnp.zeros((B, S_total), jnp.int32)
    word_mask = word_mask.at[0, 10:13].set(1).at[1, 13:15].set(1)

    word_pos_b = jax.random.randint(ks[6], (B, S_total), 0, S_char).astype(jnp.int32)
    word_pos_e = jax.random.randint(ks[7], (B, S_total), 0, S_char).astype(jnp.int32)

    inputs = {
        'text': token_ids, 'mask': mask, 'word_idx': word_idx,
        'word_mask': word_mask, 'char_len': char_len,
        'word_pos_b': word_pos_b, 'word_pos_e': word_pos_e,
    }

    ref = encoder_forward_ref(params, inputs)

    # (1) small row_tile -> multi-step grid, exercises the divisor-TR (no tail pad) path
    out = encoder_forward(params, inputs, row_tile=32)
    jax.block_until_ready(out['char_word_vec'])
    # (2) default (large) row_tile -> hardware-derived TR selection
    out2 = encoder_forward(params, inputs)
    jax.block_until_ready(out2['char_word_vec'])

    for o in (out, out2):
        assert jnp.allclose(o['char_word_vec'], ref['char_word_vec'], atol=2e-3, rtol=2e-3), \
            float(jnp.max(jnp.abs(o['char_word_vec'] - ref['char_word_vec'])))
        assert bool((o['char_word_s'] == ref['char_word_s']).all())
        assert bool((o['char_word_e'] == ref['char_word_e']).all())
        assert bool((o['char_word_mask'] == ref['char_word_mask']).all())
        assert o['char_len'] == S_char

    print("KERNEL_OK")
</pallas_src>

<mosaic_0001>
module attributes {stable_mosaic.version = 11 : i64} {
  func.func @kernel(%arg0: i32, %arg1: memref<16x128xf32, #tpu.memory_space<vmem>>, %arg2: memref<16x64xbf16, #tpu.memory_space<vmem>>, %arg3: memref<16x1xi32, #tpu.memory_space<vmem>>, %arg4: memref<64x128xbf16, #tpu.memory_space<vmem>>, %arg5: memref<8x128xf32, #tpu.memory_space<vmem>>, %arg6: memref<16x128xf32, #tpu.memory_space<vmem>>) attributes {dimension_semantics = [#tpu.dimension_semantics<parallel>], iteration_bounds = array<i64: 3>, scalar_prefetch = 0 : i64, scratch_operands = 0 : i64, tpu.core_type = #tpu.core_type<tc>, window_params = [{transform_indices = @transform_0, window_bounds = array<i64: 16, 128>}, {transform_indices = @transform_1, window_bounds = array<i64: 16, 64>}, {transform_indices = @transform_2, window_bounds = array<i64: 16, 1>}, {pipeline_mode = #tpu.pipeline_mode<synchronous>, transform_indices = @transform_3, window_bounds = array<i64: 64, 128>}, {pipeline_mode = #tpu.pipeline_mode<synchronous>, transform_indices = @transform_4, window_bounds = array<i64: 8, 128>}, {transform_indices = @transform_5, window_bounds = array<i64: 16, 128>}]} {
    %c0 = arith.constant 0 : index
    %c0_0 = arith.constant 0 : index
    %0 = vector.load %arg5[%c0, %c0_0] : memref<8x128xf32, #tpu.memory_space<vmem>>, vector<1x128xf32>
    %c1 = arith.constant 1 : index
    %c0_1 = arith.constant 0 : index
    %1 = vector.load %arg5[%c1, %c0_1] : memref<8x128xf32, #tpu.memory_space<vmem>>, vector<1x128xf32>
    %c2 = arith.constant 2 : index
    %c0_2 = arith.constant 0 : index
    %2 = vector.load %arg5[%c2, %c0_2] : memref<8x128xf32, #tpu.memory_space<vmem>>, vector<1x128xf32>
    %c3 = arith.constant 3 : index
    %c0_3 = arith.constant 0 : index
    %3 = vector.load %arg5[%c3, %c0_3] : memref<8x128xf32, #tpu.memory_space<vmem>>, vector<1x128xf32>
    %c0_4 = arith.constant 0 : index
    %c0_5 = arith.constant 0 : index
    %4 = vector.load %arg2[%c0_4, %c0_5] : memref<16x64xbf16, #tpu.memory_space<vmem>>, vector<16x64xbf16>
    %c0_6 = arith.constant 0 : index
    %c0_7 = arith.constant 0 : index
    %5 = vector.load %arg4[%c0_6, %c0_7] : memref<64x128xbf16, #tpu.memory_space<vmem>>, vector<64x128xbf16>
    %cst = arith.constant dense<0.000000e+00> : vector<16x128xf32>
    %6 = tpu.matmul %4, %5, %cst {dimension_numbers = #tpu.dot_dimension_numbers<[1], [0], [0], [1], [0, 0, 1, 1], [], []>} : vector<16x64xbf16>, vector<64x128xbf16>, vector<16x128xf32> -> vector<16x128xf32>
    %7 = vector.broadcast %0 : vector<1x128xf32> to vector<16x128xf32>
    %8 = arith.addf %6, %7 : vector<16x128xf32>
    %c0_8 = arith.constant 0 : index
    %c0_9 = arith.constant 0 : index
    %9 = vector.load %arg3[%c0_8, %c0_9] : memref<16x1xi32, #tpu.memory_space<vmem>>, vector<16x1xi32>
    %c2_i32 = arith.constant 2 : i32
    %10 = vector.broadcast %c2_i32 : i32 to vector<16x1xi32>
    %11 = arith.cmpi eq, %9, %10 : vector<16x1xi32>
    %c0_10 = arith.constant 0 : index
    %c0_11 = arith.constant 0 : index
    %12 = vector.load %arg1[%c0_10, %c0_11] : memref<16x128xf32, #tpu.memory_space<vmem>>, vector<16x128xf32>
    %13 = vector.shape_cast %11 : vector<16x1xi1> to vector<16x1xi1>
    %14 = vector.broadcast %13 : vector<16x1xi1> to vector<16x128xi1>
    %15 = arith.select %14, %8, %12 : vector<16x128xi1>, vector<16x128xf32>
    %cst_12 = arith.constant dense<0.000000e+00> : vector<16xf32>
    %16 = vector.multi_reduction <add>, %15, %cst_12 [1] : vector<16x128xf32> to vector<16xf32>
    %17 = vector.shape_cast %16 : vector<16xf32> to vector<16x1xf32>
    %cst_13 = arith.constant 0.010416667 : f32
    %18 = vector.broadcast %cst_13 : f32 to vector<16x1xf32>
    %19 = arith.mulf %17, %18 : vector<16x1xf32>
    %20 = vector.broadcast %19 : vector<16x1xf32> to vector<16x128xf32>
    %21 = arith.subf %15, %20 : vector<16x128xf32>
    %22 = vector.broadcast %3 : vector<1x128xf32> to vector<16x128xf32>
    %23 = arith.mulf %21, %22 : vector<16x128xf32>
    %24 = arith.mulf %23, %23 : vector<16x128xf32>
    %cst_14 = arith.constant dense<0.000000e+00> : vector<16xf32>
    %25 = vector.multi_reduction <add>, %24, %cst_14 [1] : vector<16x128xf32> to vector<16xf32>
    %26 = vector.shape_cast %25 : vector<16xf32> to vector<16x1xf32>
    %cst_15 = arith.constant 0.010416667 : f32
    %27 = vector.broadcast %cst_15 : f32 to vector<16x1xf32>
    %28 = arith.mulf %26, %27 : vector<16x1xf32>
    %cst_16 = arith.constant 9.99999996E-13 : f32
    %29 = vector.broadcast %cst_16 : f32 to vector<16x1xf32>
    %30 = arith.addf %28, %29 : vector<16x1xf32>
    %31 = math.rsqrt %30 : vector<16x1xf32>
    %32 = vector.broadcast %31 : vector<16x1xf32> to vector<16x128xf32>
    %33 = arith.mulf %21, %32 : vector<16x128xf32>
    %34 = vector.broadcast %1 : vector<1x128xf32> to vector<16x128xf32>
    %35 = arith.mulf %33, %34 : vector<16x128xf32>
    %36 = vector.broadcast %2 : vector<1x128xf32> to vector<16x128xf32>
    %37 = arith.addf %35, %36 : vector<16x128xf32>
    %c0_i32 = arith.constant 0 : i32
    %38 = vector.broadcast %c0_i32 : i32 to vector<16x1xi32>
    %39 = arith.cmpi sgt, %9, %38 : vector<16x1xi32>
    %cst_17 = arith.constant 0.000000e+00 : f32
    %40 = vector.shape_cast %39 : vector<16x1xi1> to vector<16x1xi1>
    %41 = vector.broadcast %40 : vector<16x1xi1> to vector<16x128xi1>
    %42 = vector.broadcast %cst_17 : f32 to vector<16x128xf32>
    %43 = arith.select %41, %37, %42 : vector<16x128xi1>, vector<16x128xf32>
    %c0_18 = arith.constant 0 : index
    %c0_19 = arith.constant 0 : index
    %44 = vector.load %arg6[%c0_18, %c0_19] : memref<16x128xf32, #tpu.memory_space<vmem>>, vector<16x128xf32>
    tpu.vector_store %arg6[%c0_18, %c0_19], %43 {strides = array<i32>} : memref<16x128xf32, #tpu.memory_space<vmem>>, vector<16x128xf32>,
    return
  }
  func.func @transform_0(%arg0: i32) -> (i32, i32) {
    %c0_i32 = arith.constant 0 : i32
    %c0_i32_0 = arith.constant 0 : i32
    return %arg0, %c0_i32 : i32, i32
  }
  func.func @transform_1(%arg0: i32) -> (i32, i32) {
    %c0_i32 = arith.constant 0 : i32
    %c0_i32_0 = arith.constant 0 : i32
    return %arg0, %c0_i32 : i32, i32
  }
  func.func @transform_2(%arg0: i32) -> (i32, i32) {
    %c0_i32 = arith.constant 0 : i32
    %c0_i32_0 = arith.constant 0 : i32
    return %arg0, %c0_i32 : i32, i32
  }
  func.func @transform_3(%arg0: i32) -> (i32, i32) {
    %c0_i32 = arith.constant 0 : i32
    %c0_i32_0 = arith.constant 0 : i32
    %c0_i32_1 = arith.constant 0 : i32
    return %c0_i32, %c0_i32_0 : i32, i32
  }
  func.func @transform_4(%arg0: i32) -> (i32, i32) {
    %c0_i32 = arith.constant 0 : i32
    %c0_i32_0 = arith.constant 0 : i32
    %c0_i32_1 = arith.constant 0 : i32
    return %c0_i32, %c0_i32_0 : i32, i32
  }
  func.func @transform_5(%arg0: i32) -> (i32, i32) {
    %c0_i32 = arith.constant 0 : i32
    %c0_i32_0 = arith.constant 0 : i32
    return %arg0, %c0_i32 : i32, i32
  }
}

</mosaic_0001>

<llo_original>
// kernel: tpu_custom_call.1
$region0: #{tpu_custom_call.1}
  #allocation0 [shape = 'u32[]', space=smem, size = 0x4, offset = 0x4, fixed_abs, tag = 'smem constant byte address 0x4 - core index']
  #allocation1 [shape = 'u32[144,128]{1,0:T(1,128)}', space=vmem, size = 0x12000, scoped, tag = 'internal scratch']
  %s0 = inlined_call_operand.vmem [shape: f32[48,128], index: 0, kind: input, shape index: {}]
  %s1 = inlined_call_operand.hbm [shape: bf16[48,64], index: 1, kind: input, shape index: {}]
  %s2 = inlined_call_operand.vmem [shape: s32[48,1], index: 2, kind: input, shape index: {}]
  %s3 = inlined_call_operand.hbm [shape: bf16[64,128], index: 3, kind: input, shape index: {}]
  %s4 = inlined_call_operand.vmem [shape: f32[8,128], index: 4, kind: input, shape index: {}]
  %s5 = inlined_call_operand.hbm [shape: f32[48,128], index: 5, kind: output, shape index: {}]
  %s6 = sld [smem:[#allocation0]]
  $region61: #{tpu_custom_call.1} parent=0
    _
  %s8 = ssub.s32 1, %s6
  %s9 = scalar_select 0, %s8, %s6
  $region1: #{tpu_custom_call.1} parent=0
    #allocation2 [shape = 'u8[8192]{0}', space=vmem, size = 0x2000, scoped, tag = 'input window, operand 1']
    #allocation3 [shape = 's32[2]{0}', space=sflag, size = 0x8, scoped, tag = 'scoped memory for tpu_custom_call.1']
    #allocation4 [shape = 's32[2]{0}', space=sflag, size = 0x8, scoped, tag = 'scoped memory for tpu_custom_call.1']
    #allocation5 [shape = 'u8[16384]{0}', space=vmem, size = 0x4000, scoped, tag = 'input window, operand 3, single buffered']
    #allocation6 [shape = 's32[1]{0}', space=sflag, size = 0x4, scoped, tag = 'scoped memory for tpu_custom_call.1']
    #allocation7 [shape = 'u8[16384]{0}', space=vmem, size = 0x4000, scoped, tag = 'output window, operand 0']
    %10 = vsyncpa [#allocation3], 0
    %s11 = scalar_lea.sflag [#allocation3], 1
    %12 = vsyncpa %s11, 0
    %13 = vsyncpa [#allocation6], 0
    %14 = vsyncpa [#allocation4], 0
    %s15 = scalar_lea.sflag [#allocation4], 1
    %16 = vsyncpa %s15, 0
    loop: start=0, step=1, limit=5
    $region2: #{tpu_custom_call.1} parent=1 // loop_pre_header
      _
    $region3: #{tpu_custom_call.1} parent=1 // loop_header
      %s18 = sphi 0, %s22
      %p19 = scmp.ge.s32.totalorder %s18, 5
      %s28 = sphi 0, %s30
      %s31 = sphi 0, %s28
      %s32 = sphi 0, %s31
      %s48 = sphi 0, %s32
      %s54 = sphi 0, %s56
      %s57 = sphi 0, %s54
      %s58 = sphi 0, %s57
      %s74 = sphi 0, %s58
      %s80 = sphi 0, %s82
      %s83 = sphi 0, %s80
      %s84 = sphi 0, %s83
      %s100 = sphi 0, %s84
      %s104 = sphi 0, %s104
      %s106 = sphi 0, %s104
      %s107 = sphi 0, %s106
      %s121 = sphi 0, %s107
      %s125 = sphi 0, %s125
      %s127 = sphi 0, %s125
      %s128 = sphi 0, %s127
      %s142 = sphi 0, %s128
      %s148 = sphi 0, %s150
      %s151 = sphi 0, %s148
      %s152 = sphi 0, %s151
      %s168 = sphi 0, %s152
    $region4: #{tpu_custom_call.1} parent=1 // loop_header_branch
      %21 = sbr.rel (%p19) target = $region8
    $region5: #{tpu_custom_call.1} parent=1 // loop_body
      %s23 = ssub.s32 %s18, 1
      %s24 = ssub.s32 %s18, 2
      %s25 = sadd.s32 %s18, 1
      %s26 = ssub.s32 %s18, %s25
      %p27 = scmp.eq.s32.totalorder %s26, 0
      %s29 = sadd.s32 %s28, 1
      %s30 = scalar_select %p27, %s28, %s29
      %p33 = pneg %p27
      %p34 = scmp.eq.s32.totalorder %s18, 2
      %p35 = por %p33, %p34
      %p36 = scmp.ne.s32.totalorder %s28, %s31
      %p37 = scmp.eq.s32.totalorder %s18, 0
      %p38 = por %p36, %p37
      %p39 = scmp.ne.s32.totalorder %s28, %s31
      %p40 = scmp.eq.s32.totalorder %s23, 2
      %p41 = por %p39, %p40
      %p42 = scmp.ne.s32.totalorder %s31, %s32
      %p43 = scmp.eq.s32.totalorder %s23, 0
      %p44 = por %p42, %p43
      %p45 = scmp.ne.s32.totalorder %s31, %s32
      %p46 = scmp.eq.s32.totalorder %s24, 2
      %p47 = por %p45, %p46
      %p49 = scmp.ne.s32.totalorder %s32, %s48
      %p50 = scmp.eq.s32.totalorder %s24, 0
      %p51 = por %p49, %p50
      %s52 = ssub.s32 %s18, %s25
      %p53 = scmp.eq.s32.totalorder %s52, 0
      %s55 = sadd.s32 %s54, 1
      %s56 = scalar_select %p53, %s54, %s55
      %p59 = pneg %p53
      %p60 = scmp.eq.s32.totalorder %s18, 2
      %p61 = por %p59, %p60
      %p62 = scmp.ne.s32.totalorder %s54, %s57
      %p63 = scmp.eq.s32.totalorder %s18, 0
      %p64 = por %p62, %p63
      %p65 = scmp.ne.s32.totalorder %s54, %s57
      %p66 = scmp.eq.s32.totalorder %s23, 2
      %p67 = por %p65, %p66
      %p68 = scmp.ne.s32.totalorder %s57, %s58
      %p69 = scmp.eq.s32.totalorder %s23, 0
      %p70 = por %p68, %p69
      %p71 = scmp.ne.s32.totalorder %s57, %s58
      %p72 = scmp.eq.s32.totalorder %s24, 2
      %p73 = por %p71, %p72
      %p75 = scmp.ne.s32.totalorder %s58, %s74
      %p76 = scmp.eq.s32.totalorder %s24, 0
      %p77 = por %p75, %p76
      %s78 = ssub.s32 %s18, %s25
      %p79 = scmp.eq.s32.totalorder %s78, 0
      %s81 = sadd.s32 %s80, 1
      %s82 = scalar_select %p79, %s80, %s81
      %p85 = pneg %p79
      %p86 = scmp.eq.s32.totalorder %s18, 2
      %p87 = por %p85, %p86
      %p88 = scmp.ne.s32.totalorder %s80, %s83
      %p89 = scmp.eq.s32.totalorder %s18, 0
      %p90 = por %p88, %p89
      %p91 = scmp.ne.s32.totalorder %s80, %s83
      %p92 = scmp.eq.s32.totalorder %s23, 2
      %p93 = por %p91, %p92
      %p94 = scmp.ne.s32.totalorder %s83, %s84
      %p95 = scmp.eq.s32.totalorder %s23, 0
      %p96 = por %p94, %p95
      %p97 = scmp.ne.s32.totalorder %s83, %s84
      %p98 = scmp.eq.s32.totalorder %s24, 2
      %p99 = por %p97, %p98
      %p101 = scmp.ne.s32.totalorder %s84, %s100
      %p102 = scmp.eq.s32.totalorder %s24, 0
      %p103 = por %p101, %p102
      %s105 = sadd.s32 %s104, 1
      %p108 = scmp.eq.s32.totalorder %s18, 2
      %p109 = scmp.ne.s32.totalorder %s104, %s106
      %p110 = scmp.eq.s32.totalorder %s18, 0
      %p111 = por %p109, %p110
      %p112 = scmp.ne.s32.totalorder %s104, %s106
      %p113 = scmp.eq.s32.totalorder %s23, 2
      %p114 = por %p112, %p113
      %p115 = scmp.ne.s32.totalorder %s106, %s107
      %p116 = scmp.eq.s32.totalorder %s23, 0
      %p117 = por %p115, %p116
      %p118 = scmp.ne.s32.totalorder %s106, %s107
      %p119 = scmp.eq.s32.totalorder %s24, 2
      %p120 = por %p118, %p119
      %p122 = scmp.ne.s32.totalorder %s107, %s121
      %p123 = scmp.eq.s32.totalorder %s24, 0
      %p124 = por %p122, %p123
      %s126 = sadd.s32 %s125, 1
      %p129 = scmp.eq.s32.totalorder %s18, 2
      %p130 = scmp.ne.s32.totalorder %s125, %s127
      %p131 = scmp.eq.s32.totalorder %s18, 0
      %p132 = por %p130, %p131
      %p133 = scmp.ne.s32.totalorder %s125, %s127
      %p134 = scmp.eq.s32.totalorder %s23, 2
      %p135 = por %p133, %p134
      %p136 = scmp.ne.s32.totalorder %s127, %s128
      %p137 = scmp.eq.s32.totalorder %s23, 0
      %p138 = por %p136, %p137
      %p139 = scmp.ne.s32.totalorder %s127, %s128
      %p140 = scmp.eq.s32.totalorder %s24, 2
      %p141 = por %p139, %p140
      %p143 = scmp.ne.s32.totalorder %s128, %s142
      %p144 = scmp.eq.s32.totalorder %s24, 0
      %p145 = por %p143, %p144
      %s146 = ssub.s32 %s18, %s25
      %p147 = scmp.eq.s32.totalorder %s146, 0
      %s149 = sadd.s32 %s148, 1
      %s150 = scalar_select %p147, %s148, %s149
      %p153 = pneg %p147
      %p154 = scmp.eq.s32.totalorder %s18, 2
      %p155 = por %p153, %p154
      %p156 = scmp.ne.s32.totalorder %s148, %s151
      %p157 = scmp.eq.s32.totalorder %s18, 0
      %p158 = por %p156, %p157
      %p159 = scmp.ne.s32.totalorder %s148, %s151
      %p160 = scmp.eq.s32.totalorder %s23, 2
      %p161 = por %p159, %p160
      %p162 = scmp.ne.s32.totalorder %s151, %s152
      %p163 = scmp.eq.s32.totalorder %s23, 0
      %p164 = por %p162, %p163
      %p165 = scmp.ne.s32.totalorder %s151, %s152
      %p166 = scmp.eq.s32.totalorder %s24, 2
      %p167 = por %p165, %p166
      %p169 = scmp.ne.s32.totalorder %s152, %s168
      %p170 = scmp.eq.s32.totalorder %s24, 0
      %p171 = por %p169, %p170
      %p172 = scmp.le.s32.totalorder 1, %s18
      %p173 = scmp.lt.s32.totalorder %s18, 4
      %p174 = pnand %p172, %p173
      %p175 = pneg %p174
      // Predicated region
      $region9: #{tpu_custom_call.1} parent=5 // pred_check
        _
      $region10: #{tpu_custom_call.1} parent=5 // pred_check_branch
        %177 = sbr.rel (%p174) target = $region12
      $region11: #{tpu_custom_call.1} parent=5 // pred_region
        %s178 = ssub.s32 %s18, 1
        // Predicated region
        $region13: #{tpu_custom_call.1} parent=11 // pred_check
          %p179 = pneg %p117
        $region14: #{tpu_custom_call.1} parent=11 // pred_check_branch
          %181 = sbr.rel (%p179) target = $region16
        $region15: #{tpu_custom_call.1} parent=11 // pred_region
          %s183 = ssub.s32 512, 512
          %184 = vsyncadd [#allocation6], %s183
          %s185 = sshll.u32 [#allocation5], 4
          %s186 = int_to_ptr.vmem [resolvable:$true] %s185
          %191 = dma.hbm_to_vmem [thread:$0]  %s3, 512, %s186, [#allocation6], 64, 64, 4
        $region16: #{tpu_custom_call.1} parent=11 // pred_fallthru
          _
        // Predicated region
        $region17: #{tpu_custom_call.1} parent=11 // pred_check
          %p192 = pneg %p138
        $region18: #{tpu_custom_call.1} parent=11 // pred_check_branch
          %194 = sbr.rel (%p192) target = $region20
        $region19: #{tpu_custom_call.1} parent=11 // pred_region
          _
        $region20: #{tpu_custom_call.1} parent=11 // pred_fallthru
          _
      $region12: #{tpu_custom_call.1} parent=5 // pred_fallthru
        _
      %p195 = scmp.lt.s32.totalorder %s18, 3
      // Predicated region
      $region21: #{tpu_custom_call.1} parent=5 // pred_check
        %p196 = pneg %p195
      $region22: #{tpu_custom_call.1} parent=5 // pred_check_branch
        %198 = sbr.rel (%p196) target = $region24
      $region23: #{tpu_custom_call.1} parent=5 // pred_region
        // Predicated region
        $region25: #{tpu_custom_call.1} parent=23 // pred_check
          %p199 = pneg %p38
        $region26: #{tpu_custom_call.1} parent=23 // pred_check_branch
          %201 = sbr.rel (%p199) target = $region28
        $region27: #{tpu_custom_call.1} parent=23 // pred_region
          %s202 = smul.u32 2, %s18
          %p203 = scmp.lt.s32.totalorder %s202, 5
          %s204 = scalar_select %p203, %s202, 5
          %s205 = smul.addr %s204, 8
          %s206 = scalar_lea.vmem %s0, %s205
          %s207 = smul.u32 2, %s18
        $region28: #{tpu_custom_call.1} parent=23 // pred_fallthru
          _
        // Predicated region
        $region29: #{tpu_custom_call.1} parent=23 // pred_check
          %p208 = pneg %p64
        $region30: #{tpu_custom_call.1} parent=23 // pred_check_branch
          %210 = sbr.rel (%p208) target = $region32
        $region31: #{tpu_custom_call.1} parent=23 // pred_region
          %s211 = sand.u32 %s54, 1
          %s212 = scalar_lea.sflag [#allocation3], %s211
          %s213 = sand.u32 %s54, 1
          %s214 = smul.addr %s213, 8
          %s215 = scalar_lea.vmem [#allocation2], %s214
          %s216 = smul.u32 2, %s18
          %s218 = ssub.s32 128, 128
          %219 = vsyncadd %s212, %s218
          %s220 = smul.addr %s216, 64
          %s221 = scalar_lea.hbm %s1, %s220
          %s222 = sshll.u32 %s215, 4
          %s223 = int_to_ptr.vmem [resolvable:$true] %s222
          %228 = dma.hbm_to_vmem [thread:$0]  %s221, 128, %s223, %s212, 64, 64, 4
        $region32: #{tpu_custom_call.1} parent=23 // pred_fallthru
          _
        // Predicated region
        $region33: #{tpu_custom_call.1} parent=23 // pred_check
          %p229 = pneg %p90
        $region34: #{tpu_custom_call.1} parent=23 // pred_check_branch
          %231 = sbr.rel (%p229) target = $region36
        $region35: #{tpu_custom_call.1} parent=23 // pred_region
          %s232 = smul.u32 2, %s18
          %p233 = scmp.lt.s32.totalorder %s232, 5
          %s234 = scalar_select %p233, %s232, 5
          %s235 = smul.addr %s234, 8
          %s236 = scalar_lea.vmem %s2, %s235
          %s237 = smul.u32 2, %s18
        $region36: #{tpu_custom_call.1} parent=23 // pred_fallthru
          _
      $region24: #{tpu_custom_call.1} parent=5 // pred_fallthru
        _
      %p238 = scmp.le.s32.totalorder 1, %s18
      %p239 = scmp.lt.s32.totalorder %s18, 4
      %p240 = pnand %p238, %p239
      %p241 = pneg %p240
      // Predicated region
      $region37: #{tpu_custom_call.1} parent=5 // pred_check
        _
      $region38: #{tpu_custom_call.1} parent=5 // pred_check_branch
        %243 = sbr.rel (%p240) target = $region40
      $region39: #{tpu_custom_call.1} parent=5 // pred_region
        %s244 = ssub.s32 %s18, 1
        %s245 = sand.u32 %s57, 1
        %s246 = scalar_lea.sflag [#allocation3], %s245
        %s247 = sand.u32 %s57, 1
        %s248 = smul.addr %s247, 8
        %s249 = scalar_lea.vmem [#allocation2], %s248
        // Predicated region
        $region41: #{tpu_custom_call.1} parent=39 // pred_check
          %p250 = pneg %p70
        $region42: #{tpu_custom_call.1} parent=39 // pred_check_branch
          %252 = sbr.rel (%p250) target = $region44
        $region43: #{tpu_custom_call.1} parent=39 // pred_region
          %253 = dma.done %s246, 128
        $region44: #{tpu_custom_call.1} parent=39 // pred_fallthru
          _
        // Predicated region
        $region45: #{tpu_custom_call.1} parent=39 // pred_check
          %p254 = pneg %p117
        $region46: #{tpu_custom_call.1} parent=39 // pred_check_branch
          %256 = sbr.rel (%p254) target = $region48
        $region47: #{tpu_custom_call.1} parent=39 // pred_region
          %257 = dma.done [#allocation6], 512
        $region48: #{tpu_custom_call.1} parent=39 // pred_fallthru
          _
        %s258 = smul.u32 2, %s23
        %p259 = scmp.lt.s32.totalorder %s258, 5
        %s260 = scalar_select %p259, %s258, 5
        %s261 = smul.addr %s260, 8
        %s262 = scalar_lea.vmem %s0, %s261
        %p263 = pneg %p44
        %p264 = pneg %p41
        %s265 = sand.u32 %s57, 1
        %s266 = scalar_lea.sflag [#allocation3], %s265
        %s267 = sand.u32 %s57, 1
        %s268 = smul.addr %s267, 8
        %s269 = scalar_lea.vmem [#allocation2], %s268
        %p270 = pneg %p70
        %p271 = pneg %p67
        %s272 = smul.u32 2, %s23
        %p273 = scmp.lt.s32.totalorder %s272, 5
        %s274 = scalar_select %p273, %s272, 5
        %s275 = smul.addr %s274, 8
        %s276 = scalar_lea.vmem %s2, %s275
        %p277 = pneg %p96
        %p278 = pneg %p93
        %p279 = pneg %p117
        %p280 = pneg %p114
        %p281 = pneg %p138
        %p282 = pneg %p135
        %p283 = pneg %p164
        %p284 = pneg %p161
        %s285 = sand.u32 %s151, 1
        %s286 = scalar_lea.sflag [#allocation4], %s285
        %s287 = sand.u32 %s151, 1
        %s288 = smul.addr %s287, 16
        %s289 = scalar_lea.vmem [#allocation7], %s288
        %s290 = smul.u32 2, %s23
        %p291 = scmp.lt.s32.totalorder %s290, 5
        %s292 = scalar_select %p291, %s290, 5
        %s293 = smul.addr %s292, 8
        %s294 = scalar_lea.vmem %s0, %s293
        %s295 = smul.u32 2, %s23
        %s296 = smul.u32 2, %s23
        %s297 = smul.u32 2, %s23
        %p298 = scmp.lt.s32.totalorder %s297, 5
        %s299 = scalar_select %p298, %s297, 5
        %s300 = smul.addr %s299, 8
        %s301 = scalar_lea.vmem %s2, %s300
        %s302 = smul.u32 2, %s23
        %s303 = smul.u32 2, %s23
        %v305 = vld [vmem:[%s4] sm:$0x1]
        %v306 = vld [vmem:[%s4 + $0x1] sm:$0x1]
        %v307 = vld [vmem:[%s4 + $0x2] sm:$0x1]
        %v308 = vld [vmem:[%s4 + $0x3] sm:$0x1]
        %v309 = vld [vmem:[%s249] sm:$0xf]
        %v310 = vld [vmem:[%s249 + $0x4] sm:$0xf]
        %v311 = vld [vmem:[#allocation5] sm:$0xf]
        %v312 = vld [vmem:[#allocation5 + $0x4] sm:$0xf]
        %v313 = vld [vmem:[#allocation5 + $0x8] sm:$0xf]
        %v314 = vld [vmem:[#allocation5 + $0xc] sm:$0xf]
        %v315 = vld [vmem:[#allocation5 + $0x10] sm:$0xf]
        %v316 = vld [vmem:[#allocation5 + $0x14] sm:$0xf]
        %v317 = vld [vmem:[#allocation5 + $0x18] sm:$0xf]
        %v318 = vld [vmem:[#allocation5 + $0x1c] sm:$0xf]
        %v319 = vlaneseq
        %v320 = vshrl.u32 %v319, 7
        %v321 = vsub.s32 0, %v320
        %v322 = vrot.slane %v305, %v321
        %v325 = vunpack.c.l.b16 %v309
        %v326 = vunpack.c.l.b16 %v310
        %v327 = vpack.c.b16 %v326, %v325
        %v336 = vunpack.c.l.b16 %v311
        %v337 = vunpack.c.l.b16 %v312
        %v338 = vunpack.c.l.b16 %v313
        %v339 = vunpack.c.l.b16 %v314
        %v340 = vunpack.c.l.b16 %v315
        %v341 = vunpack.c.l.b16 %v316
        %v342 = vunpack.c.l.b16 %v317
        %v343 = vunpack.c.l.b16 %v318
        %v344 = vpack.c.b16 %v337, %v336
        %v345 = vpack.c.b16 %v339, %v338
        %v346 = vpack.c.b16 %v341, %v340
        %v347 = vpack.c.b16 %v343, %v342
        %vm352 = vcmask 523264
        %v354 = vsel %vm352, %v327, 0
        %356 = vmatprep.subr.bf16.mxu0 0
        %357 = vmatpush1.bf16.msra.mxu0 %v344
        %358 = vmatprep.subr.bf16.mxu0 0
        %359 = vmatpush1.bf16.msra.mxu0 %v345
        %360 = vmatprep.subr.bf16.mxu0 0
        %361 = vmatpush1.bf16.msra.mxu0 %v346
        %362 = vmatprep.subr.bf16.mxu0 0
        %363 = vmatpush1.bf16.msra.mxu0 %v347
        %364 = vmatprep.subr.bf16.mxu0 0
        %365 = vmatpush1.bf16.msra.mxu0 0
        %366 = vmatprep.subr.bf16.mxu0 0
        %367 = vmatpush1.bf16.msra.mxu0 0
        %368 = vmatprep.subr.bf16.mxu0 0
        %369 = vmatpush1.bf16.msra.mxu0 0
        %370 = vmatprep.subr.bf16.mxu0 0
        %371 = vmatpush1.bf16.msra.mxu0 0
        %372 = vmatprep.subr.bf16.mxu0 0
        %373 = vmatpush1.bf16.msra.mxu0 0
        %374 = vmatprep.subr.bf16.mxu0 0
        %375 = vmatpush1.bf16.msra.mxu0 0
        %376 = vmatprep.subr.bf16.mxu0 0
        %377 = vmatpush1.bf16.msra.mxu0 0
        %378 = vmatprep.subr.bf16.mxu0 0
        %379 = vmatpush1.bf16.msra.mxu0 0
        %380 = vmatprep.subr.bf16.mxu0 0
        %381 = vmatpush1.bf16.msra.mxu0 0
        %382 = vmatprep.subr.bf16.mxu0 0
        %383 = vmatpush1.bf16.msra.mxu0 0
        %384 = vmatprep.subr.bf16.mxu0 0
        %385 = vmatpush1.bf16.msra.mxu0 0
        %386 = vmatprep.subr.bf16.mxu0 0
        %387 = vmatpush1.bf16.msra.mxu0 0
        %388 = vmatprep.mubr.bf16.mxu0 0
        %389 = vmatmul.mubr.bf16.gmra.mrb[0].mxu0 %v354
        %v390 = vpop.f32.mrb[0].mxu0
        %v391 = vadd.f32 %v322, %v390
        %v392 = vpop.f32.mrb[0].mxu0
        %v393 = vpop.f32.mrb[0].mxu0
        %v394 = vadd.f32 %v322, %v393
        %v395 = vpop.f32.mrb[0].mxu0
        %396 = vdwg.mxu0
        %v397 = vld [vmem:[%s301] sm:$0xff]
        %v398 = vld [vmem:[%s301 + $0x8] sm:$0xff]
        %vm399 = vcmp.eq.s32.totalorder %v397, 2
        %vm400 = vcmp.eq.s32.totalorder %v398, 2
        %v401 = vld [vmem:[%s294] sm:$0xff]
        %v402 = vld [vmem:[%s294 + $0x8] sm:$0xff]
        %v403 = vsel %vm399, 1, 0
        %v404 = vsel %vm400, 1, 0
        %405 = vset.pattern.permute.xlu0 0
        %406 = vperm.xlu0 %405, %v403
        %v407 = vpop.permute.xlu0 %406
        %408 = vset.pattern.permute.xlu0 0
        %409 = vperm.xlu0 %408, %v404
        %v410 = vpop.permute.xlu0 %409
        %vm411 = vcmp.eq.s32.totalorder %v407, 1
        %vm412 = vcmp.eq.s32.totalorder %v410, 1
        %v413 = vsel %vm411, %v391, %v401
        %v414 = vsel %vm412, %v394, %v402
        %415 = vadd.xlane.f32.xlu0 %v413
        %v416 = vpop.xlane.xlu0 %415
        %417 = vadd.xlane.f32.xlu0 %v414
        %v418 = vpop.xlane.xlu0 %417
        %v419 = vmul.f32 %v416, 0.010416667
        %v420 = vmul.f32 %v418, 0.010416667
        %v421 = vsub.f32 %v413, %v419
        %v422 = vsub.f32 %v414, %v420
        %v423 = vlaneseq
        %v424 = vshrl.u32 %v423, 7
        %v425 = vsub.s32 0, %v424
        %v426 = vrot.slane %v308, %v425
        %v427 = vmul.f32 %v421, %v426
        %v428 = vmul.f32 %v422, %v426
        %v429 = vmul.f32 %v427, %v427
        %v430 = vmul.f32 %v428, %v428
        %431 = vadd.xlane.f32.xlu0 %v429
        %v432 = vpop.xlane.xlu0 %431
        %433 = vadd.xlane.f32.xlu0 %v430
        %v434 = vpop.xlane.xlu0 %433
        %v435 = vmul.f32 %v432, 0.010416667
        %v436 = vmul.f32 %v434, 0.010416667
        %v437 = vadd.f32 %v435, 1e-12
        %v438 = vadd.f32 %v436, 1e-12
        %v439 = vrsqrt.pop %v437
        %v440 = vrsqrt.pop %v438
        %v441 = vmul.f32 %v421, %v439
        %v442 = vmul.f32 %v422, %v440
        %v443 = vlaneseq
        %v444 = vshrl.u32 %v443, 7
        %v445 = vsub.s32 0, %v444
        %v446 = vrot.slane %v306, %v445
        %v447 = vmul.f32 %v441, %v446
        %v448 = vmul.f32 %v442, %v446
        %v449 = vlaneseq
        %v450 = vshrl.u32 %v449, 7
        %v451 = vsub.s32 0, %v450
        %v452 = vrot.slane %v307, %v451
        %v453 = vadd.f32 %v447, %v452
        %v454 = vadd.f32 %v448, %v452
        %vm455 = vcmp.gt.s32.totalorder %v397, 0
        %vm456 = vcmp.gt.s32.totalorder %v398, 0
        %v457 = vsel %vm455, 1, 0
        %v458 = vsel %vm456, 1, 0
        %459 = vset.pattern.permute.xlu0 0
        %460 = vperm.xlu0 %459, %v457
        %v461 = vpop.permute.xlu0 %460
        %462 = vset.pattern.permute.xlu0 0
        %463 = vperm.xlu0 %462, %v458
        %v464 = vpop.permute.xlu0 %463
        %vm465 = vcmp.eq.s32.totalorder %v461, 1
        %vm466 = vcmp.eq.s32.totalorder %v464, 1
        %v467 = vsel %vm465, %v453, 0.0
        %v468 = vsel %vm466, %v454, 0.0
        %469 = vst [vmem:[%s289] sm:$0xff] %v467
        %470 = vst [vmem:[%s289 + $0x8] sm:$0xff] %v468
        %s471 = sand.u32 %s151, 1
        %s472 = scalar_lea.sflag [#allocation4], %s471
        %s473 = sand.u32 %s151, 1
        %s474 = smul.addr %s473, 16
        %s475 = scalar_lea.vmem [#allocation7], %s474
        // Predicated region
        $region49: #{tpu_custom_call.1} parent=39 // pred_check
          %p476 = pneg %p161
        $region50: #{tpu_custom_call.1} parent=39 // pred_check_branch
          %478 = sbr.rel (%p476) target = $region52
        $region51: #{tpu_custom_call.1} parent=39 // pred_region
          %s479 = smul.u32 2, %s23
          %s481 = ssub.s32 256, 256
          %482 = vsyncadd %s472, %s481
          %s483 = smul.addr %s479, 128
          %s484 = scalar_lea.hbm %s5, %s483
          %s485 = sshll.u32 %s475, 4
          %s486 = int_to_ptr.vmem [resolvable:$true] %s485
          %491 = dma.vmem_to_hbm [thread:$0]  %s486, 256, %s484, %s472, 128, 128, 8
        $region52: #{tpu_custom_call.1} parent=39 // pred_fallthru
          _
      $region40: #{tpu_custom_call.1} parent=5 // pred_fallthru
        _
      %p492 = scmp.le.s32.totalorder 2, %s18
      // Predicated region
      $region53: #{tpu_custom_call.1} parent=5 // pred_check
        %p493 = pneg %p492
      $region54: #{tpu_custom_call.1} parent=5 // pred_check_branch
        %495 = sbr.rel (%p493) target = $region56
      $region55: #{tpu_custom_call.1} parent=5 // pred_region
        %s496 = ssub.s32 %s18, 2
        // Predicated region
        $region57: #{tpu_custom_call.1} parent=55 // pred_check
          %p497 = pneg %p167
        $region58: #{tpu_custom_call.1} parent=55 // pred_check_branch
          %499 = sbr.rel (%p497) target = $region60
        $region59: #{tpu_custom_call.1} parent=55 // pred_region
          %s500 = sand.u32 %s152, 1
          %s501 = scalar_lea.sflag [#allocation4], %s500
          %s502 = sand.u32 %s152, 1
          %s503 = smul.addr %s502, 16
          %s504 = scalar_lea.vmem [#allocation7], %s503
          %505 = dma.done %s501, 256
        $region60: #{tpu_custom_call.1} parent=55 // pred_fallthru
          _
      $region56: #{tpu_custom_call.1} parent=5 // pred_fallthru
        _
    $region6: #{tpu_custom_call.1} parent=1 // loop_footer
      %s22 = sadd.s32 1, %s18
    $region7: #{tpu_custom_call.1} parent=1 // loop_footer_branch
      %17 = sbr.rel target = $region3
    $region8: #{tpu_custom_call.1} parent=1 // loop_exit
      _
    %506 = vsyncpa [#allocation3], 1
    %s507 = scalar_lea.sflag [#allocation3], 1
    %508 = vsyncpa %s507, 1
    %509 = vsyncpa [#allocation6], 1
    %510 = vsyncpa [#allocation4], 1
    %s511 = scalar_lea.sflag [#allocation4], 1
    %512 = vsyncpa %s511, 1

</llo_original>
